<compile_context>
chip_gen: v5e
topology: v5e:2x2
jax: 0.10.0
libtpu: 0.0.40
codegen_flags: <defaults>
</compile_context>

<pallas_src>
import functools

import jax
import jax.numpy as jnp
from jax.experimental import pallas as pl
from jax.experimental.pallas import tpu as pltpu

EPS = 1e-5
BN_TYPE_NEW = True  # corresponds to args.BN_type == 'new'


# ----------------------------- kernels ------------------------------------ #

def _stats_kernel(x_ref, g_ref, b_ref, rm_ref, rv_ref,          # inputs
                  a_ref, c_ref, mean_ref, var_ref,               # outputs
                  acc_sum, acc_sq,                               # scratch
                  *, hw, tile_m, total_m):
    n = pl.program_id(0)
    m = pl.program_id(1)

    @pl.when(jnp.logical_and(n == 0, m == 0))
    def _():
        acc_sum[...] = jnp.zeros_like(acc_sum)
        acc_sq[...] = jnp.zeros_like(acc_sq)

    x = x_ref[0].astype(jnp.float32)                 # (C, tile_m)
    if hw % tile_m != 0:
        # ragged tail along H*W: mask out-of-bounds lanes from the sums
        col = jax.lax.broadcasted_iota(jnp.int32, x.shape, 1)
        valid = (m * tile_m + col) < hw
        x = jnp.where(valid, x, 0.0)

    acc_sum[...] += jnp.sum(x, axis=1, keepdims=True)
    acc_sq[...] += jnp.sum(x * x, axis=1, keepdims=True)

    is_last = jnp.logical_and(n == pl.num_programs(0) - 1,
                              m == pl.num_programs(1) - 1)

    @pl.when(is_last)
    def _():
        denom = max(total_m - 1, 1)                  # ddof=1 (torch.var default)
        mean = acc_sum[...] / total_m
        var = (acc_sq[...] - total_m * mean * mean) / denom

        invstd = jax.lax.rsqrt(var + EPS)
        rv = rv_ref[...]
        rm = rm_ref[...]
        scale = jnp.sqrt(var + EPS) * jax.lax.rsqrt(rv + EPS)
        if BN_TYPE_NEW:
            scale = jnp.clip(scale, 1.0 / 5.0, 5.0)
        shift = (mean - rm) * scale * invstd

        gamma = g_ref[...]
        beta = b_ref[...]
        # y = (y1*scale + shift)*gamma + beta  ==  a*x + c
        a = gamma * scale * invstd
        c = gamma * (shift - mean * scale * invstd) + beta

        a_ref[...] = a
        c_ref[...] = c
        mean_ref[...] = mean
        var_ref[...] = var


def _apply_kernel(x_ref, a_ref, c_ref, y_ref):
    x = x_ref[0].astype(jnp.float32)                 # (C, tile_m)
    y = a_ref[...] * x + c_ref[...]                  # fused per-channel affine
    y_ref[0] = y.astype(y_ref.dtype)


# ----------------------------- wrapper ------------------------------------ #

def _pick_tile_m(hw, c):
    """Lane tile (last dim). Multiple of 128 (or full extent), budgeted so
    ~4 live tiles (double-buffered in + out) stay <= ~8 MiB even on v7x."""
    budget_elems = (2 * 1024 * 1024) // (4 * c)          # 2 MiB per tile
    max_tile = max(128, (budget_elems // 128) * 128)
    if hw % 128 == 0:
        return min(hw, 2048, max_tile)
    if hw <= min(2048, max_tile):
        return hw                                        # full extent, no tail
    return min(1024, max_tile)                           # masked ragged tail


def osr_forward(x_nchw, gamma, beta, run_mean, run_var, training=True):
    """OSR forward. Returns (y, batch_mean, batch_var) when training, else y."""
    N, C, H, W = x_nchw.shape
    HW = H * W
    M = N * HW
    x = x_nchw.reshape(N, C, HW)                         # free view of NCHW
    g = gamma.reshape(C, 1).astype(jnp.float32)
    b = beta.reshape(C, 1).astype(jnp.float32)
    rm = run_mean.reshape(C, 1).astype(jnp.float32)
    rv = run_var.reshape(C, 1).astype(jnp.float32)

    tile_m = _pick_tile_m(HW, C)
    n_mb = pl.cdiv(HW, tile_m)
    grid = (N, n_mb)

    x_spec = pl.BlockSpec((1, C, tile_m), lambda n, m: (n, 0, m))
    vec_spec = pl.BlockSpec((C, 1), lambda n, m: (0, 0))   # VMEM-resident
    vmem_limit = 32 << 20

    if training:
        a, c, mean, var = pl.pallas_call(
            functools.partial(_stats_kernel, hw=HW, tile_m=tile_m, total_m=M),
            grid=grid,
            in_specs=[x_spec, vec_spec, vec_spec, vec_spec, vec_spec],
            out_specs=(vec_spec, vec_spec, vec_spec, vec_spec),
            out_shape=(jax.ShapeDtypeStruct((C, 1), jnp.float32),
                       jax.ShapeDtypeStruct((C, 1), jnp.float32),
                       jax.ShapeDtypeStruct((C, 1), jnp.float32),
                       jax.ShapeDtypeStruct((C, 1), jnp.float32)),
            scratch_shapes=[pltpu.VMEM((C, 1), jnp.float32),
                            pltpu.VMEM((C, 1), jnp.float32)],
            compiler_params=pltpu.CompilerParams(
                dimension_semantics=("arbitrary", "arbitrary"),
                vmem_limit_bytes=vmem_limit),
        )(x, g, b, rm, rv)
    else:
        # eval: a = gamma/sqrt(run_var+eps), c = beta - run_mean*a (tiny, host-side)
        a = g * jax.lax.rsqrt(rv + EPS)
        c = b - rm * a
        mean = var = None

    y = pl.pallas_call(
        _apply_kernel,
        grid=grid,
        in_specs=[x_spec, vec_spec, vec_spec],
        out_specs=x_spec,
        out_shape=jax.ShapeDtypeStruct((N, C, HW), x_nchw.dtype),
        compiler_params=pltpu.CompilerParams(
            dimension_semantics=("parallel", "parallel"),
            vmem_limit_bytes=vmem_limit),
    )(x, a, c)
    y = y.reshape(N, C, H, W)

    if training:
        return y, mean.reshape(C), var.reshape(C)
    return y


# ----------------------------- reference ---------------------------------- #

def _ref_train(x, gamma, beta, run_mean, run_var):
    C = x.shape[1]
    shp = (1, C, 1, 1)
    mean = x.mean(axis=(0, 2, 3))
    var = x.var(axis=(0, 2, 3), ddof=1)
    invstd = 1.0 / jnp.sqrt(var + EPS)
    y1 = (x - mean.reshape(shp)) * invstd.reshape(shp)
    scale = jnp.sqrt(var + EPS) / jnp.sqrt(run_var + EPS)
    if BN_TYPE_NEW:
        scale = jnp.clip(scale, 1.0 / 5.0, 5.0)
    shift = (mean - run_mean) * scale / jnp.sqrt(var + EPS)
    y = (y1 * scale.reshape(shp) + shift.reshape(shp)) * gamma.reshape(shp) \
        + beta.reshape(shp)
    return y, mean, var


# ------------------------------- main -------------------------------------- #

if __name__ == "__main__":
    key = jax.random.PRNGKey(0)
    N, C, H, W = 2, 4, 16, 16          # num_features = C = 4
    T = 4                               # OSR(T=4, num_features=4)

    x = jax.random.normal(key, (N, C, H, W), dtype=jnp.float32) * 2.0 + 0.5

    # deterministic parameter init, matching OSR.__init__
    gamma = jnp.ones((C,), jnp.float32)
    beta = jnp.zeros((C,), jnp.float32)
    run_mean = jnp.zeros((C,), jnp.float32)
    run_var = jnp.ones((C,), jnp.float32)

    # training-mode forward (the OSR hot path)
    y, bmean, bvar = osr_forward(x, gamma, beta, run_mean, run_var, training=True)
    jax.block_until_ready(y)

    # eval-mode forward (batch_norm_elemt path)
    y_eval = osr_forward(x, gamma, beta, run_mean, run_var, training=False)
    jax.block_until_ready(y_eval)

    # correctness check against pure-JAX reference
    y_ref, mean_ref, var_ref = _ref_train(x, gamma, beta, run_mean, run_var)
    assert jnp.allclose(y, y_ref, rtol=1e-4, atol=1e-4), "train output mismatch"
    assert jnp.allclose(bmean, mean_ref, rtol=1e-5, atol=1e-5), "mean mismatch"
    assert jnp.allclose(bvar, var_ref, rtol=1e-4, atol=1e-5), "var mismatch"

    shp = (1, C, 1, 1)
    y_eval_ref = (x - run_mean.reshape(shp)) / jnp.sqrt(run_var.reshape(shp) + EPS) \
        * gamma.reshape(shp) + beta.reshape(shp)
    assert jnp.allclose(y_eval, y_eval_ref, rtol=1e-4, atol=1e-4), "eval mismatch"

    print("KERNEL_OK")
</pallas_src>

<mosaic_0001>
module attributes {stable_mosaic.version = 11 : i64} {
  func.func @_stats_kernel(%arg0: i32, %arg1: i32, %arg2: memref<1x4x256xf32, #tpu.memory_space<vmem>>, %arg3: memref<4x1xf32, #tpu.memory_space<vmem>>, %arg4: memref<4x1xf32, #tpu.memory_space<vmem>>, %arg5: memref<4x1xf32, #tpu.memory_space<vmem>>, %arg6: memref<4x1xf32, #tpu.memory_space<vmem>>, %arg7: memref<4x1xf32, #tpu.memory_space<vmem>>, %arg8: memref<4x1xf32, #tpu.memory_space<vmem>>, %arg9: memref<4x1xf32, #tpu.memory_space<vmem>>, %arg10: memref<4x1xf32, #tpu.memory_space<vmem>>, %arg11: memref<4x1xf32, #tpu.memory_space<vmem>>, %arg12: memref<4x1xf32, #tpu.memory_space<vmem>>) attributes {dimension_semantics = [#tpu.dimension_semantics<arbitrary>, #tpu.dimension_semantics<arbitrary>], iteration_bounds = array<i64: 2, 1>, scalar_prefetch = 0 : i64, scratch_operands = 2 : i64, tpu.core_type = #tpu.core_type<tc>, window_params = [{transform_indices = @transform_0, window_bounds = array<i64: 1, 4, 256>}, {pipeline_mode = #tpu.pipeline_mode<synchronous>, transform_indices = @transform_1, window_bounds = array<i64: 4, 1>}, {pipeline_mode = #tpu.pipeline_mode<synchronous>, transform_indices = @transform_2, window_bounds = array<i64: 4, 1>}, {pipeline_mode = #tpu.pipeline_mode<synchronous>, transform_indices = @transform_3, window_bounds = array<i64: 4, 1>}, {pipeline_mode = #tpu.pipeline_mode<synchronous>, transform_indices = @transform_4, window_bounds = array<i64: 4, 1>}, {pipeline_mode = #tpu.pipeline_mode<synchronous>, transform_indices = @transform_5, window_bounds = array<i64: 4, 1>}, {pipeline_mode = #tpu.pipeline_mode<synchronous>, transform_indices = @transform_6, window_bounds = array<i64: 4, 1>}, {pipeline_mode = #tpu.pipeline_mode<synchronous>, transform_indices = @transform_7, window_bounds = array<i64: 4, 1>}, {pipeline_mode = #tpu.pipeline_mode<synchronous>, transform_indices = @transform_8, window_bounds = array<i64: 4, 1>}]} {
    %c0_i32 = arith.constant 0 : i32
    %0 = arith.cmpi eq, %arg0, %c0_i32 : i32
    %c0_i32_0 = arith.constant 0 : i32
    %1 = arith.cmpi eq, %arg1, %c0_i32_0 : i32
    %2 = arith.andi %0, %1 : i1
    %3 = arith.extui %2 : i1 to i32
    %c0_i32_1 = arith.constant 0 : i32
    %4 = arith.cmpi ne, %3, %c0_i32_1 : i32
    scf.if %4 {
      %cst_15 = arith.constant 0.000000e+00 : f32
      %23 = vector.broadcast %cst_15 : f32 to vector<4x1xf32>
      %c0_16 = arith.constant 0 : index
      %c0_17 = arith.constant 0 : index
      %24 = vector.load %arg11[%c0_16, %c0_17] : memref<4x1xf32, #tpu.memory_space<vmem>>, vector<4x1xf32>
      tpu.vector_store %arg11[%c0_16, %c0_17], %23 {strides = array<i32>} : memref<4x1xf32, #tpu.memory_space<vmem>>, vector<4x1xf32>,
      %cst_18 = arith.constant 0.000000e+00 : f32
      %25 = vector.broadcast %cst_18 : f32 to vector<4x1xf32>
      %c0_19 = arith.constant 0 : index
      %c0_20 = arith.constant 0 : index
      %26 = vector.load %arg12[%c0_19, %c0_20] : memref<4x1xf32, #tpu.memory_space<vmem>>, vector<4x1xf32>
      tpu.vector_store %arg12[%c0_19, %c0_20], %25 {strides = array<i32>} : memref<4x1xf32, #tpu.memory_space<vmem>>, vector<4x1xf32>,
    } else {
    }
    %c0 = arith.constant 0 : index
    %c0_2 = arith.constant 0 : index
    %c0_3 = arith.constant 0 : index
    %5 = vector.load %arg2[%c0, %c0_2, %c0_3] : memref<1x4x256xf32, #tpu.memory_space<vmem>>, vector<1x4x256xf32>
    %6 = vector.shape_cast %5 : vector<1x4x256xf32> to vector<4x256xf32>
    %c0_4 = arith.constant 0 : index
    %c0_5 = arith.constant 0 : index
    %7 = vector.load %arg11[%c0_4, %c0_5] : memref<4x1xf32, #tpu.memory_space<vmem>>, vector<4x1xf32>
    %cst = arith.constant dense<0.000000e+00> : vector<4xf32>
    %8 = vector.multi_reduction <add>, %6, %cst [1] : vector<4x256xf32> to vector<4xf32>
    %9 = vector.shape_cast %8 : vector<4xf32> to vector<4x1xf32>
    %10 = arith.addf %7, %9 : vector<4x1xf32>
    %c0_6 = arith.constant 0 : index
    %c0_7 = arith.constant 0 : index
    %11 = vector.load %arg11[%c0_6, %c0_7] : memref<4x1xf32, #tpu.memory_space<vmem>>, vector<4x1xf32>
    tpu.vector_store %arg11[%c0_6, %c0_7], %10 {strides = array<i32>} : memref<4x1xf32, #tpu.memory_space<vmem>>, vector<4x1xf32>,
    %c0_8 = arith.constant 0 : index
    %c0_9 = arith.constant 0 : index
    %12 = vector.load %arg12[%c0_8, %c0_9] : memref<4x1xf32, #tpu.memory_space<vmem>>, vector<4x1xf32>
    %13 = arith.mulf %6, %6 : vector<4x256xf32>
    %cst_10 = arith.constant dense<0.000000e+00> : vector<4xf32>
    %14 = vector.multi_reduction <add>, %13, %cst_10 [1] : vector<4x256xf32> to vector<4xf32>
    %15 = vector.shape_cast %14 : vector<4xf32> to vector<4x1xf32>
    %16 = arith.addf %12, %15 : vector<4x1xf32>
    %c0_11 = arith.constant 0 : index
    %c0_12 = arith.constant 0 : index
    %17 = vector.load %arg12[%c0_11, %c0_12] : memref<4x1xf32, #tpu.memory_space<vmem>>, vector<4x1xf32>
    tpu.vector_store %arg12[%c0_11, %c0_12], %16 {strides = array<i32>} : memref<4x1xf32, #tpu.memory_space<vmem>>, vector<4x1xf32>,
    %c1_i32 = arith.constant 1 : i32
    %18 = arith.cmpi eq, %arg0, %c1_i32 : i32
    %c0_i32_13 = arith.constant 0 : i32
    %19 = arith.cmpi eq, %arg1, %c0_i32_13 : i32
    %20 = arith.andi %18, %19 : i1
    %21 = arith.extui %20 : i1 to i32
    %c0_i32_14 = arith.constant 0 : i32
    %22 = arith.cmpi ne, %21, %c0_i32_14 : i32
    scf.if %22 {
      %c0_15 = arith.constant 0 : index
      %c0_16 = arith.constant 0 : index
      %23 = vector.load %arg11[%c0_15, %c0_16] : memref<4x1xf32, #tpu.memory_space<vmem>>, vector<4x1xf32>
      %cst_17 = arith.constant 5.120000e+02 : f32
      %24 = vector.broadcast %cst_17 : f32 to vector<4x1xf32>
      %25 = arith.divf %23, %24 : vector<4x1xf32>
      %c0_18 = arith.constant 0 : index
      %c0_19 = arith.constant 0 : index
      %26 = vector.load %arg12[%c0_18, %c0_19] : memref<4x1xf32, #tpu.memory_space<vmem>>, vector<4x1xf32>
      %cst_20 = arith.constant 5.120000e+02 : f32
      %27 = vector.broadcast %cst_20 : f32 to vector<4x1xf32>
      %28 = arith.mulf %27, %25 : vector<4x1xf32>
      %29 = arith.mulf %28, %25 : vector<4x1xf32>
      %30 = arith.subf %26, %29 : vector<4x1xf32>
      %cst_21 = arith.constant 5.110000e+02 : f32
      %31 = vector.broadcast %cst_21 : f32 to vector<4x1xf32>
      %32 = arith.divf %30, %31 : vector<4x1xf32>
      %cst_22 = arith.constant 9.99999974E-6 : f32
      %33 = vector.broadcast %cst_22 : f32 to vector<4x1xf32>
      %34 = arith.addf %32, %33 : vector<4x1xf32>
      %35 = math.rsqrt %34 : vector<4x1xf32>
      %c0_23 = arith.constant 0 : index
      %c0_24 = arith.constant 0 : index
      %36 = vector.load %arg6[%c0_23, %c0_24] : memref<4x1xf32, #tpu.memory_space<vmem>>, vector<4x1xf32>
      %c0_25 = arith.constant 0 : index
      %c0_26 = arith.constant 0 : index
      %37 = vector.load %arg5[%c0_25, %c0_26] : memref<4x1xf32, #tpu.memory_space<vmem>>, vector<4x1xf32>
      %cst_27 = arith.constant 9.99999974E-6 : f32
      %38 = vector.broadcast %cst_27 : f32 to vector<4x1xf32>
      %39 = arith.addf %32, %38 : vector<4x1xf32>
      %40 = math.sqrt %39 : vector<4x1xf32>
      %cst_28 = arith.constant 9.99999974E-6 : f32
      %41 = vector.broadcast %cst_28 : f32 to vector<4x1xf32>
      %42 = arith.addf %36, %41 : vector<4x1xf32>
      %43 = math.rsqrt %42 : vector<4x1xf32>
      %44 = arith.mulf %40, %43 : vector<4x1xf32>
      %cst_29 = arith.constant 2.000000e-01 : f32
      %cst_30 = arith.constant 5.000000e+00 : f32
      %45 = vector.broadcast %cst_29 : f32 to vector<4x1xf32>
      %46 = arith.maximumf %45, %44 : vector<4x1xf32>
      %47 = vector.broadcast %cst_30 : f32 to vector<4x1xf32>
      %48 = arith.minimumf %47, %46 : vector<4x1xf32>
      %49 = arith.subf %25, %37 : vector<4x1xf32>
      %50 = arith.mulf %49, %48 : vector<4x1xf32>
      %51 = arith.mulf %50, %35 : vector<4x1xf32>
      %c0_31 = arith.constant 0 : index
      %c0_32 = arith.constant 0 : index
      %52 = vector.load %arg3[%c0_31, %c0_32] : memref<4x1xf32, #tpu.memory_space<vmem>>, vector<4x1xf32>
      %c0_33 = arith.constant 0 : index
      %c0_34 = arith.constant 0 : index
      %53 = vector.load %arg4[%c0_33, %c0_34] : memref<4x1xf32, #tpu.memory_space<vmem>>, vector<4x1xf32>
      %54 = arith.mulf %52, %48 : vector<4x1xf32>
      %55 = arith.mulf %54, %35 : vector<4x1xf32>
      %56 = arith.mulf %25, %48 : vector<4x1xf32>
      %57 = arith.mulf %56, %35 : vector<4x1xf32>
      %58 = arith.subf %51, %57 : vector<4x1xf32>
      %59 = arith.mulf %52, %58 : vector<4x1xf32>
      %60 = arith.addf %59, %53 : vector<4x1xf32>
      %c0_35 = arith.constant 0 : index
      %c0_36 = arith.constant 0 : index
      %61 = vector.load %arg7[%c0_35, %c0_36] : memref<4x1xf32, #tpu.memory_space<vmem>>, vector<4x1xf32>
      tpu.vector_store %arg7[%c0_35, %c0_36], %55 {strides = array<i32>} : memref<4x1xf32, #tpu.memory_space<vmem>>, vector<4x1xf32>,
      %c0_37 = arith.constant 0 : index
      %c0_38 = arith.constant 0 : index
      %62 = vector.load %arg8[%c0_37, %c0_38] : memref<4x1xf32, #tpu.memory_space<vmem>>, vector<4x1xf32>
      tpu.vector_store %arg8[%c0_37, %c0_38], %60 {strides = array<i32>} : memref<4x1xf32, #tpu.memory_space<vmem>>, vector<4x1xf32>,
      %c0_39 = arith.constant 0 : index
      %c0_40 = arith.constant 0 : index
      %63 = vector.load %arg9[%c0_39, %c0_40] : memref<4x1xf32, #tpu.memory_space<vmem>>, vector<4x1xf32>
      tpu.vector_store %arg9[%c0_39, %c0_40], %25 {strides = array<i32>} : memref<4x1xf32, #tpu.memory_space<vmem>>, vector<4x1xf32>,
      %c0_41 = arith.constant 0 : index
      %c0_42 = arith.constant 0 : index
      %64 = vector.load %arg10[%c0_41, %c0_42] : memref<4x1xf32, #tpu.memory_space<vmem>>, vector<4x1xf32>
      tpu.vector_store %arg10[%c0_41, %c0_42], %32 {strides = array<i32>} : memref<4x1xf32, #tpu.memory_space<vmem>>, vector<4x1xf32>,
    } else {
    }
    return
  }
  func.func @transform_0(%arg0: i32, %arg1: i32) -> (i32, i32, i32) {
    %c0_i32 = arith.constant 0 : i32
    %c0_i32_0 = arith.constant 0 : i32
    return %arg0, %c0_i32, %arg1 : i32, i32, i32
  }
  func.func @transform_1(%arg0: i32, %arg1: i32) -> (i32, i32) {
    %c0_i32 = arith.constant 0 : i32
    %c0_i32_0 = arith.constant 0 : i32
    %c0_i32_1 = arith.constant 0 : i32
    return %c0_i32, %c0_i32_0 : i32, i32
  }
  func.func @transform_2(%arg0: i32, %arg1: i32) -> (i32, i32) {
    %c0_i32 = arith.constant 0 : i32
    %c0_i32_0 = arith.constant 0 : i32
    %c0_i32_1 = arith.constant 0 : i32
    return %c0_i32, %c0_i32_0 : i32, i32
  }
  func.func @transform_3(%arg0: i32, %arg1: i32) -> (i32, i32) {
    %c0_i32 = arith.constant 0 : i32
    %c0_i32_0 = arith.constant 0 : i32
    %c0_i32_1 = arith.constant 0 : i32
    return %c0_i32, %c0_i32_0 : i32, i32
  }
  func.func @transform_4(%arg0: i32, %arg1: i32) -> (i32, i32) {
    %c0_i32 = arith.constant 0 : i32
    %c0_i32_0 = arith.constant 0 : i32
    %c0_i32_1 = arith.constant 0 : i32
    return %c0_i32, %c0_i32_0 : i32, i32
  }
  func.func @transform_5(%arg0: i32, %arg1: i32) -> (i32, i32) {
    %c0_i32 = arith.constant 0 : i32
    %c0_i32_0 = arith.constant 0 : i32
    %c0_i32_1 = arith.constant 0 : i32
    return %c0_i32, %c0_i32_0 : i32, i32
  }
  func.func @transform_6(%arg0: i32, %arg1: i32) -> (i32, i32) {
    %c0_i32 = arith.constant 0 : i32
    %c0_i32_0 = arith.constant 0 : i32
    %c0_i32_1 = arith.constant 0 : i32
    return %c0_i32, %c0_i32_0 : i32, i32
  }
  func.func @transform_7(%arg0: i32, %arg1: i32) -> (i32, i32) {
    %c0_i32 = arith.constant 0 : i32
    %c0_i32_0 = arith.constant 0 : i32
    %c0_i32_1 = arith.constant 0 : i32
    return %c0_i32, %c0_i32_0 : i32, i32
  }
  func.func @transform_8(%arg0: i32, %arg1: i32) -> (i32, i32) {
    %c0_i32 = arith.constant 0 : i32
    %c0_i32_0 = arith.constant 0 : i32
    %c0_i32_1 = arith.constant 0 : i32
    return %c0_i32, %c0_i32_0 : i32, i32
  }
}

</mosaic_0001>

<llo_original>
// kernel: tpu_custom_call.1
$region0: #{tpu_custom_call.1}
  #allocation0 [shape = 'u32[]', space=smem, size = 0x4, offset = 0x4, fixed_abs, tag = 'smem constant byte address 0x4 - core index']
  #allocation1 [shape = 'u32[72,128]{1,0:T(1,128)}', space=vmem, size = 0x9000, scoped, tag = 'internal scratch']
  #allocation2 [shape = 'f32[4,1]{1,0:T(4,128)}', space=vmem, size = 0x800, scoped, tag = 'scratch operand']
  #allocation3 [shape = 'f32[4,1]{1,0:T(4,128)}', space=vmem, size = 0x800, scoped, tag = 'scratch operand']
  %s0 = inlined_call_operand.hbm [shape: f32[2,4,256], index: 0, kind: input, shape index: {}]
  %s1 = inlined_call_operand.vmem [shape: f32[4,1], index: 1, kind: input, shape index: {}]
  %s2 = inlined_call_operand.vmem [shape: f32[4,1], index: 2, kind: input, shape index: {}]
  %s3 = inlined_call_operand.vmem [shape: f32[4,1], index: 3, kind: input, shape index: {}]
  %s4 = inlined_call_operand.vmem [shape: f32[4,1], index: 4, kind: input, shape index: {}]
  %s5 = inlined_call_operand.vmem [shape: f32[4,1], index: 5, kind: output, shape index: {0}]
  %s6 = inlined_call_operand.vmem [shape: f32[4,1], index: 6, kind: output, shape index: {1}]
  %s7 = inlined_call_operand.vmem [shape: f32[4,1], index: 7, kind: output, shape index: {2}]
  %s8 = inlined_call_operand.vmem [shape: f32[4,1], index: 8, kind: output, shape index: {3}]
  %9 = xla_tuple %s5, %s6, %s7, %s8
  %s10 = sld [smem:[#allocation0]]
  $region89: #{tpu_custom_call.1} parent=0
    _
  %s12 = ssub.s32 1, %s10
  %s13 = scalar_select 0, %s12, %s10
  $region1: #{tpu_custom_call.1} parent=0
    #allocation4 [shape = 'u8[8192]{0}', space=vmem, size = 0x2000, scoped, tag = 'input window, operand 0']
    #allocation5 [shape = 's32[2]{0}', space=sflag, size = 0x8, scoped, tag = 'scoped memory for tpu_custom_call.1']
    %14 = vsyncpa [#allocation5], 0
    %s15 = scalar_lea.sflag [#allocation5], 1
    %16 = vsyncpa %s15, 0
    loop: start=0, step=1, limit=4
    $region2: #{tpu_custom_call.1} parent=1 // loop_pre_header
      _
    $region3: #{tpu_custom_call.1} parent=1 // loop_header
      %s18 = sphi 0, %s22
      %p19 = scmp.ge.s32.totalorder %s18, 4
      %s25 = sphi 0, %s37
      %s26 = sphi 0, %s33
      %s27 = sphi 0, %s25
      %s28 = sphi 0, %s26
      %s29 = sphi 0, %s27
      %s30 = sphi 0, %s28
      %s42 = sphi 0, %s44
      %s45 = sphi 0, %s42
      %s46 = sphi 0, %s45
      %s62 = sphi 0, %s46
      %s66 = sphi 0, %s66
      %s68 = sphi 0, %s66
      %s69 = sphi 0, %s68
      %s83 = sphi 0, %s69
      %s87 = sphi 0, %s87
      %s89 = sphi 0, %s87
      %s90 = sphi 0, %s89
      %s104 = sphi 0, %s90
      %s108 = sphi 0, %s108
      %s110 = sphi 0, %s108
      %s111 = sphi 0, %s110
      %s125 = sphi 0, %s111
      %s129 = sphi 0, %s129
      %s131 = sphi 0, %s129
      %s132 = sphi 0, %s131
      %s146 = sphi 0, %s132
      %s150 = sphi 0, %s150
      %s152 = sphi 0, %s150
      %s153 = sphi 0, %s152
      %s167 = sphi 0, %s153
      %s171 = sphi 0, %s171
      %s173 = sphi 0, %s171
      %s174 = sphi 0, %s173
      %s188 = sphi 0, %s174
      %s192 = sphi 0, %s192
      %s194 = sphi 0, %s192
      %s195 = sphi 0, %s194
      %s209 = sphi 0, %s195
      %s213 = sphi 0, %s213
      %s215 = sphi 0, %s213
      %s216 = sphi 0, %s215
      %s230 = sphi 0, %s216
    $region4: #{tpu_custom_call.1} parent=1 // loop_header_branch
      %21 = sbr.rel (%p19) target = $region8
    $region5: #{tpu_custom_call.1} parent=1 // loop_body
      %s23 = ssub.s32 %s18, 1
      %s24 = ssub.s32 %s18, 2
      %s31 = sadd.s32 1, %s26
      %p32 = scmp.ge.s32.totalorder %s31, 1
      %s33 = scalar_select %p32, 0, %s31
      %s34 = sadd.s32 1, %s25
      %s35 = scalar_select %p32, %s34, %s25
      %p36 = scmp.ge.s32.totalorder %s35, 2
      %s37 = scalar_select %p36, 0, %s35
      %s38 = ssub.s32 %s25, %s37
      %s39 = ssub.s32 %s26, %s33
      %s40 = sor.u32 %s38, %s39
      %p41 = scmp.eq.s32.totalorder %s40, 0
      %s43 = sadd.s32 %s42, 1
      %s44 = scalar_select %p41, %s42, %s43
      %p47 = pneg %p41
      %p48 = scmp.eq.s32.totalorder %s18, 1
      %p49 = por %p47, %p48
      %p50 = scmp.ne.s32.totalorder %s42, %s45
      %p51 = scmp.eq.s32.totalorder %s18, 0
      %p52 = por %p50, %p51
      %p53 = scmp.ne.s32.totalorder %s42, %s45
      %p54 = scmp.eq.s32.totalorder %s23, 1
      %p55 = por %p53, %p54
      %p56 = scmp.ne.s32.totalorder %s45, %s46
      %p57 = scmp.eq.s32.totalorder %s23, 0
      %p58 = por %p56, %p57
      %p59 = scmp.ne.s32.totalorder %s45, %s46
      %p60 = scmp.eq.s32.totalorder %s24, 1
      %p61 = por %p59, %p60
      %p63 = scmp.ne.s32.totalorder %s46, %s62
      %p64 = scmp.eq.s32.totalorder %s24, 0
      %p65 = por %p63, %p64
      %s67 = sadd.s32 %s66, 1
      %p70 = scmp.eq.s32.totalorder %s18, 1
      %p71 = scmp.ne.s32.totalorder %s66, %s68
      %p72 = scmp.eq.s32.totalorder %s18, 0
      %p73 = por %p71, %p72
      %p74 = scmp.ne.s32.totalorder %s66, %s68
      %p75 = scmp.eq.s32.totalorder %s23, 1
      %p76 = por %p74, %p75
      %p77 = scmp.ne.s32.totalorder %s68, %s69
      %p78 = scmp.eq.s32.totalorder %s23, 0
      %p79 = por %p77, %p78
      %p80 = scmp.ne.s32.totalorder %s68, %s69
      %p81 = scmp.eq.s32.totalorder %s24, 1
      %p82 = por %p80, %p81
      %p84 = scmp.ne.s32.totalorder %s69, %s83
      %p85 = scmp.eq.s32.totalorder %s24, 0
      %p86 = por %p84, %p85
      %s88 = sadd.s32 %s87, 1
      %p91 = scmp.eq.s32.totalorder %s18, 1
      %p92 = scmp.ne.s32.totalorder %s87, %s89
      %p93 = scmp.eq.s32.totalorder %s18, 0
      %p94 = por %p92, %p93
      %p95 = scmp.ne.s32.totalorder %s87, %s89
      %p96 = scmp.eq.s32.totalorder %s23, 1
      %p97 = por %p95, %p96
      %p98 = scmp.ne.s32.totalorder %s89, %s90
      %p99 = scmp.eq.s32.totalorder %s23, 0
      %p100 = por %p98, %p99
      %p101 = scmp.ne.s32.totalorder %s89, %s90
      %p102 = scmp.eq.s32.totalorder %s24, 1
      %p103 = por %p101, %p102
      %p105 = scmp.ne.s32.totalorder %s90, %s104
      %p106 = scmp.eq.s32.totalorder %s24, 0
      %p107 = por %p105, %p106
      %s109 = sadd.s32 %s108, 1
      %p112 = scmp.eq.s32.totalorder %s18, 1
      %p113 = scmp.ne.s32.totalorder %s108, %s110
      %p114 = scmp.eq.s32.totalorder %s18, 0
      %p115 = por %p113, %p114
      %p116 = scmp.ne.s32.totalorder %s108, %s110
      %p117 = scmp.eq.s32.totalorder %s23, 1
      %p118 = por %p116, %p117
      %p119 = scmp.ne.s32.totalorder %s110, %s111
      %p120 = scmp.eq.s32.totalorder %s23, 0
      %p121 = por %p119, %p120
      %p122 = scmp.ne.s32.totalorder %s110, %s111
      %p123 = scmp.eq.s32.totalorder %s24, 1
      %p124 = por %p122, %p123
      %p126 = scmp.ne.s32.totalorder %s111, %s125
      %p127 = scmp.eq.s32.totalorder %s24, 0
      %p128 = por %p126, %p127
      %s130 = sadd.s32 %s129, 1
      %p133 = scmp.eq.s32.totalorder %s18, 1
      %p134 = scmp.ne.s32.totalorder %s129, %s131
      %p135 = scmp.eq.s32.totalorder %s18, 0
      %p136 = por %p134, %p135
      %p137 = scmp.ne.s32.totalorder %s129, %s131
      %p138 = scmp.eq.s32.totalorder %s23, 1
      %p139 = por %p137, %p138
      %p140 = scmp.ne.s32.totalorder %s131, %s132
      %p141 = scmp.eq.s32.totalorder %s23, 0
      %p142 = por %p140, %p141
      %p143 = scmp.ne.s32.totalorder %s131, %s132
      %p144 = scmp.eq.s32.totalorder %s24, 1
      %p145 = por %p143, %p144
      %p147 = scmp.ne.s32.totalorder %s132, %s146
      %p148 = scmp.eq.s32.totalorder %s24, 0
      %p149 = por %p147, %p148
      %s151 = sadd.s32 %s150, 1
      %p154 = scmp.eq.s32.totalorder %s18, 1
      %p155 = scmp.ne.s32.totalorder %s150, %s152
      %p156 = scmp.eq.s32.totalorder %s18, 0
      %p157 = por %p155, %p156
      %p158 = scmp.ne.s32.totalorder %s150, %s152
      %p159 = scmp.eq.s32.totalorder %s23, 1
      %p160 = por %p158, %p159
      %p161 = scmp.ne.s32.totalorder %s152, %s153
      %p162 = scmp.eq.s32.totalorder %s23, 0
      %p163 = por %p161, %p162
      %p164 = scmp.ne.s32.totalorder %s152, %s153
      %p165 = scmp.eq.s32.totalorder %s24, 1
      %p166 = por %p164, %p165
      %p168 = scmp.ne.s32.totalorder %s153, %s167
      %p169 = scmp.eq.s32.totalorder %s24, 0
      %p170 = por %p168, %p169
      %s172 = sadd.s32 %s171, 1
      %p175 = scmp.eq.s32.totalorder %s18, 1
      %p176 = scmp.ne.s32.totalorder %s171, %s173
      %p177 = scmp.eq.s32.totalorder %s18, 0
      %p178 = por %p176, %p177
      %p179 = scmp.ne.s32.totalorder %s171, %s173
      %p180 = scmp.eq.s32.totalorder %s23, 1
      %p181 = por %p179, %p180
      %p182 = scmp.ne.s32.totalorder %s173, %s174
      %p183 = scmp.eq.s32.totalorder %s23, 0
      %p184 = por %p182, %p183
      %p185 = scmp.ne.s32.totalorder %s173, %s174
      %p186 = scmp.eq.s32.totalorder %s24, 1
      %p187 = por %p185, %p186
      %p189 = scmp.ne.s32.totalorder %s174, %s188
      %p190 = scmp.eq.s32.totalorder %s24, 0
      %p191 = por %p189, %p190
      %s193 = sadd.s32 %s192, 1
      %p196 = scmp.eq.s32.totalorder %s18, 1
      %p197 = scmp.ne.s32.totalorder %s192, %s194
      %p198 = scmp.eq.s32.totalorder %s18, 0
      %p199 = por %p197, %p198
      %p200 = scmp.ne.s32.totalorder %s192, %s194
      %p201 = scmp.eq.s32.totalorder %s23, 1
      %p202 = por %p200, %p201
      %p203 = scmp.ne.s32.totalorder %s194, %s195
      %p204 = scmp.eq.s32.totalorder %s23, 0
      %p205 = por %p203, %p204
      %p206 = scmp.ne.s32.totalorder %s194, %s195
      %p207 = scmp.eq.s32.totalorder %s24, 1
      %p208 = por %p206, %p207
      %p210 = scmp.ne.s32.totalorder %s195, %s209
      %p211 = scmp.eq.s32.totalorder %s24, 0
      %p212 = por %p210, %p211
      %s214 = sadd.s32 %s213, 1
      %p217 = scmp.eq.s32.totalorder %s18, 1
      %p218 = scmp.ne.s32.totalorder %s213, %s215
      %p219 = scmp.eq.s32.totalorder %s18, 0
      %p220 = por %p218, %p219
      %p221 = scmp.ne.s32.totalorder %s213, %s215
      %p222 = scmp.eq.s32.totalorder %s23, 1
      %p223 = por %p221, %p222
      %p224 = scmp.ne.s32.totalorder %s215, %s216
      %p225 = scmp.eq.s32.totalorder %s23, 0
      %p226 = por %p224, %p225
      %p227 = scmp.ne.s32.totalorder %s215, %s216
      %p228 = scmp.eq.s32.totalorder %s24, 1
      %p229 = por %p227, %p228
      %p231 = scmp.ne.s32.totalorder %s216, %s230
      %p232 = scmp.eq.s32.totalorder %s24, 0
      %p233 = por %p231, %p232
      %p234 = scmp.le.s32.totalorder 1, %s18
      %p235 = scmp.lt.s32.totalorder %s18, 3
      %p236 = pnand %p234, %p235
      %p237 = pneg %p236
      // Predicated region
      $region9: #{tpu_custom_call.1} parent=5 // pred_check
        _
      $region10: #{tpu_custom_call.1} parent=5 // pred_check_branch
        %239 = sbr.rel (%p236) target = $region12
      $region11: #{tpu_custom_call.1} parent=5 // pred_region
        %s240 = ssub.s32 %s18, 1
        // Predicated region
        $region13: #{tpu_custom_call.1} parent=11 // pred_check
          %p241 = pneg %p79
        $region14: #{tpu_custom_call.1} parent=11 // pred_check_branch
          %243 = sbr.rel (%p241) target = $region16
        $region15: #{tpu_custom_call.1} parent=11 // pred_region
          _
        $region16: #{tpu_custom_call.1} parent=11 // pred_fallthru
          _
        // Predicated region
        $region17: #{tpu_custom_call.1} parent=11 // pred_check
          %p244 = pneg %p100
        $region18: #{tpu_custom_call.1} parent=11 // pred_check_branch
          %246 = sbr.rel (%p244) target = $region20
        $region19: #{tpu_custom_call.1} parent=11 // pred_region
          _
        $region20: #{tpu_custom_call.1} parent=11 // pred_fallthru
          _
        // Predicated region
        $region21: #{tpu_custom_call.1} parent=11 // pred_check
          %p247 = pneg %p121
        $region22: #{tpu_custom_call.1} parent=11 // pred_check_branch
          %249 = sbr.rel (%p247) target = $region24
        $region23: #{tpu_custom_call.1} parent=11 // pred_region
          _
        $region24: #{tpu_custom_call.1} parent=11 // pred_fallthru
          _
        // Predicated region
        $region25: #{tpu_custom_call.1} parent=11 // pred_check
          %p250 = pneg %p142
        $region26: #{tpu_custom_call.1} parent=11 // pred_check_branch
          %252 = sbr.rel (%p250) target = $region28
        $region27: #{tpu_custom_call.1} parent=11 // pred_region
          _
        $region28: #{tpu_custom_call.1} parent=11 // pred_fallthru
          _
      $region12: #{tpu_custom_call.1} parent=5 // pred_fallthru
        _
      %p253 = scmp.lt.s32.totalorder %s18, 2
      // Predicated region
      $region29: #{tpu_custom_call.1} parent=5 // pred_check
        %p254 = pneg %p253
      $region30: #{tpu_custom_call.1} parent=5 // pred_check_branch
        %256 = sbr.rel (%p254) target = $region32
      $region31: #{tpu_custom_call.1} parent=5 // pred_region
        // Predicated region
        $region33: #{tpu_custom_call.1} parent=31 // pred_check
          %p257 = pneg %p52
        $region34: #{tpu_custom_call.1} parent=31 // pred_check_branch
          %259 = sbr.rel (%p257) target = $region36
        $region35: #{tpu_custom_call.1} parent=31 // pred_region
          %s260 = sand.u32 %s42, 1
          %s261 = scalar_lea.sflag [#allocation5], %s260
          %s262 = sand.u32 %s42, 1
          %s263 = smul.addr %s262, 8
          %s264 = scalar_lea.vmem [#allocation4], %s263
          %s265 = smul.u32 2, %s26
          %267 = vsyncadd %s261, 0
          %s268 = smul.addr %s25, 2
          %s269 = sadd.s32 %s265, %s268
          %s270 = smul.addr %s269, 4
          %s271 = scalar_lea.hbm %s0, %s270
          %s273 = sshll.u32 %s271, 4
          %s274 = int_to_ptr.hbm [resolvable:$true] %s273
          %s275 = sshll.u32 %s264, 4
          %s276 = int_to_ptr.vmem [resolvable:$true] %s275
          %278 = dma.hbm_to_vmem [thread:$0]  %s274, 128, %s276, %s261
        $region36: #{tpu_custom_call.1} parent=31 // pred_fallthru
          _
      $region32: #{tpu_custom_call.1} parent=5 // pred_fallthru
        _
      %p279 = scmp.le.s32.totalorder 1, %s18
      %p280 = scmp.lt.s32.totalorder %s18, 3
      %p281 = pnand %p279, %p280
      %p282 = pneg %p281
      // Predicated region
      $region37: #{tpu_custom_call.1} parent=5 // pred_check
        _
      $region38: #{tpu_custom_call.1} parent=5 // pred_check_branch
        %284 = sbr.rel (%p281) target = $region40
      $region39: #{tpu_custom_call.1} parent=5 // pred_region
        %s285 = ssub.s32 %s18, 1
        %s286 = sand.u32 %s45, 1
        %s287 = scalar_lea.sflag [#allocation5], %s286
        %s288 = sand.u32 %s45, 1
        %s289 = smul.addr %s288, 8
        %s290 = scalar_lea.vmem [#allocation4], %s289
        // Predicated region
        $region41: #{tpu_custom_call.1} parent=39 // pred_check
          %p291 = pneg %p58
        $region42: #{tpu_custom_call.1} parent=39 // pred_check_branch
          %293 = sbr.rel (%p291) target = $region44
        $region43: #{tpu_custom_call.1} parent=39 // pred_region
          %295 = dma.done %s287, 128
        $region44: #{tpu_custom_call.1} parent=39 // pred_fallthru
          _
        %s296 = sand.u32 %s45, 1
        %s297 = scalar_lea.sflag [#allocation5], %s296
        %s298 = sand.u32 %s45, 1
        %s299 = smul.addr %s298, 8
        %s300 = scalar_lea.vmem [#allocation4], %s299
        %p301 = pneg %p58
        %p302 = pneg %p55
        %p303 = pneg %p79
        %p304 = pneg %p76
        %p305 = pneg %p100
        %p306 = pneg %p97
        %p307 = pneg %p121
        %p308 = pneg %p118
        %p309 = pneg %p142
        %p310 = pneg %p139
        %p311 = pneg %p163
        %p312 = pneg %p160
        %p313 = pneg %p184
        %p314 = pneg %p181
        %p315 = pneg %p205
        %p316 = pneg %p202
        %p317 = pneg %p226
        %p318 = pneg %p223
        %s319 = smul.u32 2, %s28
        %p320 = scmp.eq.s32.totalorder %s27, 0
        %p321 = scmp.eq.s32.totalorder %s28, 0
        %p322 = pnand %p320, %p321
        %p323 = pneg %p322
        // Predicated region
        $region45: #{tpu_custom_call.1} parent=39 // pred_check
          _
        $region46: #{tpu_custom_call.1} parent=39 // pred_check_branch
          %325 = sbr.rel (%p322) target = $region48
        $region47: #{tpu_custom_call.1} parent=39 // pred_region
          %vm326 = vcmask 3072
          %327 = vst.msk [vmem:[#allocation2] sm:$0xf] %vm326, 0.0
          %328 = vst.msk [vmem:[#allocation3] sm:$0xf] %vm326, 0.0
        $region48: #{tpu_custom_call.1} parent=39 // pred_fallthru
          _
        %v329 = vld [vmem:[%s290] sm:$0xff]
        %v330 = vld [vmem:[#allocation2] sm:$0xf]
        %332 = vst [vmem:[#allocation1] ss:$2 sm:$0xff] %v329
        %v333 = vld.sshfl [vmem:[#allocation1] sm:$0xff pattern:$0x75316420]
        %v334 = vld.sshfl [vmem:[#allocation1 + $0x8] sm:$0xff pattern:$0x75316420]
        %vm337 = vcmask 1043456
        %v338 = vsel %vm337, %v333, 0.0
        %v339 = vsel %vm337, %v334, 0.0
        %v340 = vadd.f32 %v338, %v339
        %341 = vadd.xlane.f32.xlu0 %v340
        %v342 = vpop.xlane.xlu0 %341
        %v343 = vadd.f32 %v330, %v342
        %vm344 = vcmask 3072
        %345 = vst.msk [vmem:[#allocation2] sm:$0xf] %vm344, %v343
        %v346 = vld [vmem:[#allocation3] sm:$0xf]
        %v347 = vmul.f32 %v329, %v329
        %349 = vst [vmem:[#allocation1] ss:$2 sm:$0xff] %v347
        %v350 = vld.sshfl [vmem:[#allocation1] sm:$0xff pattern:$0x75316420]
        %v351 = vld.sshfl [vmem:[#allocation1 + $0x8] sm:$0xff pattern:$0x75316420]
        %v354 = vsel %vm337, %v350, 0.0
        %v355 = vsel %vm337, %v351, 0.0
        %v356 = vadd.f32 %v354, %v355
        %357 = vadd.xlane.f32.xlu0 %v356
        %v358 = vpop.xlane.xlu0 %357
        %v359 = vadd.f32 %v346, %v358
        %360 = vst.msk [vmem:[#allocation3] sm:$0xf] %vm344, %v359
        %p361 = scmp.eq.s32.totalorder %s27, 1
        %p362 = pnand %p361, %p321
        %p363 = pneg %p362
        // Predicated region
        $region49: #{tpu_custom_call.1} parent=39 // pred_check
          _
        $region50: #{tpu_custom_call.1} parent=39 // pred_check_branch
          %365 = sbr.rel (%p362) target = $region52
        $region51: #{tpu_custom_call.1} parent=39 // pred_region
          %v366 = vld [vmem:[#allocation2] sm:$0xf]
          %v367 = vrcp.pop 512.0
          %v368 = vmul.f32 512.0, %v367
          %v369 = vsub.f32 1.0, %v368
          %v370 = vmul.f32 %v367, %v369
          %v371 = vadd.f32 %v367, %v370
          %vm372 = vweird.f32 %v367
          %v373 = vsel %vm372, %v367, %v371
          %v374 = vmul.f32 %v366, %v373
          %v375 = vld [vmem:[#allocation3] sm:$0xf]
          %v376 = vmul.f32 %v374, 512.0
          %v377 = vmul.f32 %v376, %v374
          %v378 = vsub.f32 %v375, %v377
          %v379 = vrcp.pop 511.0
          %v380 = vmul.f32 511.0, %v379
          %v381 = vsub.f32 1.0, %v380
          %v382 = vmul.f32 %v379, %v381
          %v383 = vadd.f32 %v379, %v382
          %vm384 = vweird.f32 %v379
          %v385 = vsel %vm384, %v379, %v383
          %v386 = vmul.f32 %v378, %v385
          %v387 = vadd.f32 %v386, 1e-05
          %v388 = vrsqrt.pop %v387
          %v389 = vmul.f32 %v388, %v387
          %v390 = vmul.f32 %v389, %v388
          %v391 = vmul.f32 0.5, %v390
          %v392 = vsub.f32 1.5, %v391
          %v393 = vmul.f32 %v388, %v392
          %vm394 = vweird.f32 %v387
          %vm395 = vweird.f32 %v388
          %vm396 = vmor %vm394, %vm395
          %v397 = vsel %vm396, %v388, %v393
          %v398 = vld [vmem:[%s4] sm:$0xf]
          %v399 = vld [vmem:[%s3] sm:$0xf]
          %v400 = vrsqrt.pop %v387
          %v401 = vmul.f32 %v400, %v387
          %v402 = vmul.f32 %v401, %v400
          %v403 = vmul.f32 0.5, %v402
          %v404 = vsub.f32 1.5, %v403
          %v405 = vmul.f32 %v400, %v404
          %v406 = vmul.f32 %v387, %v405
          %vm407 = vcmp.eq.f32.partialorder %v387, inf
          %v408 = vsel %vm407, %v387, %v406
          %vm409 = vcmp.eq.f32.partialorder %v387, 0.0
          %v410 = vand.u32 %v387, 2147483648
          %v411 = vsel %vm409, %v410, %v408
          %v412 = vadd.f32 %v398, 1e-05
          %v413 = vrsqrt.pop %v412
          %v414 = vmul.f32 %v413, %v412
          %v415 = vmul.f32 %v414, %v413
          %v416 = vmul.f32 0.5, %v415
          %v417 = vsub.f32 1.5, %v416
          %v418 = vmul.f32 %v413, %v417
          %vm419 = vweird.f32 %v412
          %vm420 = vweird.f32 %v413
          %vm421 = vmor %vm419, %vm420
          %v422 = vsel %vm421, %v413, %v418
          %v423 = vmul.f32 %v411, %v422
          %v424 = vmax.f32 %v423, 0.2
          %v425 = vmin.f32 %v424, 5.0
          %v426 = vsub.f32 %v374, %v399
          %v427 = vmul.f32 %v426, %v425
          %v428 = vmul.f32 %v427, %v397
          %v429 = vld [vmem:[%s1] sm:$0xf]
          %v430 = vld [vmem:[%s2] sm:$0xf]
          %v431 = vmul.f32 %v429, %v425
          %v432 = vmul.f32 %v431, %v397
          %v433 = vmul.f32 %v374, %v425
          %v434 = vmul.f32 %v433, %v397
          %v435 = vsub.f32 %v428, %v434
          %v436 = vmul.f32 %v429, %v435
          %v437 = vadd.f32 %v436, %v430
          %438 = vst.msk [vmem:[%s5] sm:$0xf] %vm344, %v432
          %439 = vst.msk [vmem:[%s6] sm:$0xf] %vm344, %v437
          %440 = vst.msk [vmem:[%s7] sm:$0xf] %vm344, %v374
          %441 = vst.msk [vmem:[%s8] sm:$0xf] %vm344, %v386
        $region52: #{tpu_custom_call.1} parent=39 // pred_fallthru
          _
        // Predicated region
        $region53: #{tpu_custom_call.1} parent=39 // pred_check
          %p442 = pneg %p160
        $region54: #{tpu_custom_call.1} parent=39 // pred_check_branch
          %444 = sbr.rel (%p442) target = $region56
        $region55: #{tpu_custom_call.1} parent=39 // pred_region
          _
        $region56: #{tpu_custom_call.1} parent=39 // pred_fallthru
          _
        // Predicated region
        $region57: #{tpu_custom_call.1} parent=39 // pred_check
          %p445 = pneg %p181
        $region58: #{tpu_custom_call.1} parent=39 // pred_check_branch
          %447 = sbr.rel (%p445) target = $region60
        $region59: #{tpu_custom_call.1} parent=39 // pred_region
          _
        $region60: #{tpu_custom_call.1} parent=39 // pred_fallthru
          _
        // Predicated region
        $region61: #{tpu_custom_call.1} parent=39 // pred_check
          %p448 = pneg %p202
        $region62: #{tpu_custom_call.1} parent=39 // pred_check_branch
          %450 = sbr.rel (%p448) target = $region64
        $region63: #{tpu_custom_call.1} parent=39 // pred_region
          _
        $region64: #{tpu_custom_call.1} parent=39 // pred_fallthru
          _
        // Predicated region
        $region65: #{tpu_custom_call.1} parent=39 // pred_check
          %p451 = pneg %p223
        $region66: #{tpu_custom_call.1} parent=39 // pred_check_branch
          %453 = sbr.rel (%p451) target = $region68
        $region67: #{tpu_custom_call.1} parent=39 // pred_region
          _
        $region68: #{tpu_custom_call.1} parent=39 // pred_fallthru
          _
        // Predicated region
        $region69: #{tpu_custom_call.1} parent=39 // pred_check
          %p454 = pneg %p160
        $region70: #{tpu_custom_call.1} parent=39 // pred_check_branch
          %456 = sbr.rel (%p454) target = $region72
        $region71: #{tpu_custom_call.1} parent=39 // pred_region
          _
        $region72: #{tpu_custom_call.1} parent=39 // pred_fallthru
          _
        // Predicated region
        $region73: #{tpu_custom_call.1} parent=39 // pred_check
          %p457 = pneg %p181
        $region74: #{tpu_custom_call.1} parent=39 // pred_check_branch
          %459 = sbr.rel (%p457) target = $region76
        $region75: #{tpu_custom_call.1} parent=39 // pred_region
          _
        $region76: #{tpu_custom_call.1} parent=39 // pred_fallthru
          _
        // Predicated region
        $region77: #{tpu_custom_call.1} parent=39 // pred_check
          %p460 = pneg %p202
        $region78: #{tpu_custom_call.1} parent=39 // pred_check_branch
          %462 = sbr.rel (%p460) target = $region80
        $region79: #{tpu_custom_call.1} parent=39 // pred_region
          _
        $region80: #{tpu_custom_call.1} parent=39 // pred_fallthru
          _
        // Predicated region
        $region81: #{tpu_custom_call.1} parent=39 // pred_check
          %p463 = pneg %p223
        $region82: #{tpu_custom_call.1} parent=39 // pred_check_branch
          %465 = sbr.rel (%p463) target = $region84
        $region83: #{tpu_custom_call.1} parent=39 // pred_region
          _
        $region84: #{tpu_custom_call.1} parent=39 // pred_fallthru
          _
      $region40: #{tpu_custom_call.1} parent=5 // pred_fallthru
        _
      %p466 = scmp.le.s32.totalorder 2, %s18
      // Predicated region
      $region85: #{tpu_custom_call.1} parent=5 // pred_check
        %p467 = pneg %p466
      $region86: #{tpu_custom_call.1} parent=5 // pred_check_branch
        %469 = sbr.rel (%p467) target = $region88
      $region87: #{tpu_custom_call.1} parent=5 // pred_region
        %s470 = ssub.s32 %s18, 2
      $region88: #{tpu_custom_call.1} parent=5 // pred_fallthru
        _
    $region6: #{tpu_custom_call.1} parent=1 // loop_footer
      %s22 = sadd.s32 1, %s18
    $region7: #{tpu_custom_call.1} parent=1 // loop_footer_branch
      %17 = sbr.rel target = $region3
    $region8: #{tpu_custom_call.1} parent=1 // loop_exit
      _
    %471 = vsyncpa [#allocation5], 1
    %s472 = scalar_lea.sflag [#allocation5], 1
    %473 = vsyncpa %s472, 1

</llo_original>
